<compile_context>
chip_gen: v7x
topology: tpu7x:2x2x1
jax: 0.10.0
libtpu: 0.0.40
codegen_flags: <defaults>
</compile_context>

<pallas_src>
import functools

import jax
import jax.numpy as jnp
from jax import lax
from jax.experimental import pallas as pl
from jax.experimental.pallas import tpu as pltpu

LAYERNORM_EPS = 1e-5            # PyTorch nn.LayerNorm default
INV_SQRT2 = 0.7071067811865476  # 1/sqrt(2) for exact-erf GELU

_RESIDENT_W1_BUDGET = 6 * 1024 * 1024   # bf16 bytes of w1 we keep fully VMEM-resident
_X_TILE_BUDGET = 6 * 1024 * 1024        # per-buffer budget for the streamed x tile
_KTILED_VMEM_BUDGET = 12 * 1024 * 1024  # conservative working-set target (all gens)


def _round_up(x, m):
    return ((x + m - 1) // m) * m


# ---------------------------------------------------------------------------
# kernels
# ---------------------------------------------------------------------------
def _epilogue(projected, w2_ref, p_ref, o_ref):
    """bias1 -> GELU -> fc -> (dropout=id) -> residual -> LayerNorm, all in f32."""
    b1 = p_ref[0:1, :]
    b2 = p_ref[1:2, :]
    gamma = p_ref[2:3, :]
    beta = p_ref[3:4, :]

    projected = projected + b1

    # exact GELU (nn.GELU() default: approximate='none' -> erf form).
    # TODO(synk): tanh-GELU would route through the EUP and free VALU slots, but
    # changes numerics vs PyTorch approximate='none'; keeping erf.
    h = 0.5 * projected * (1.0 + lax.erf(projected * INV_SQRT2))

    # fc = Linear(shared -> shared); bf16 MXU inputs, f32 accumulation.
    y = jnp.dot(h.astype(w2_ref.dtype), w2_ref[...],
                preferred_element_type=jnp.float32) + b2

    # TODO(synk): dropout is identity at inference time; training-mode dropout
    # (pltpu.prng_random_bits masking) intentionally omitted.
    z = y + projected

    # LayerNorm over the last dim (biased variance, like PyTorch).
    mean = jnp.mean(z, axis=-1, keepdims=True)
    centered = z - mean
    var = jnp.mean(centered * centered, axis=-1, keepdims=True)
    normed = centered * lax.rsqrt(var + LAYERNORM_EPS)
    o_ref[...] = (normed * gamma + beta).astype(o_ref.dtype)


def _fused_single_kernel(x_ref, w1_ref, w2_ref, p_ref, o_ref):
    """Grid = (batch tiles,). Whole layer per batch tile, w1/w2 VMEM-resident."""
    projected = jnp.dot(x_ref[...], w1_ref[...], preferred_element_type=jnp.float32)
    _epilogue(projected, w2_ref, p_ref, o_ref)


def _fused_ktiled_kernel(x_ref, w1_ref, w2_ref, p_ref, o_ref, acc_ref):
    """Grid = (batch tile i, K tile k). K last, accumulated into f32 acc_ref."""
    k = pl.program_id(1)
    partial = jnp.dot(x_ref[...], w1_ref[...], preferred_element_type=jnp.float32)

    @pl.when(k == 0)
    def _init():
        acc_ref[...] = partial          # direct write: no zero-fill pass

    @pl.when(k > 0)
    def _accum():
        acc_ref[...] += partial

    @pl.when(k == pl.num_programs(1) - 1)
    def _finalize():
        _epilogue(acc_ref[...], w2_ref, p_ref, o_ref)


# ---------------------------------------------------------------------------
# one-time parameter preparation (hoisted out of the per-call path)
# ---------------------------------------------------------------------------
def _choose_tk(d_in, d_out):
    d_in128 = _round_up(d_in, 128)
    for tk in (2048, 1024, 512, 256, 128):
        if tk > d_in128:
            continue
        # double-buffered x / w1 tiles (TM<=512), resident w2, acc + out tiles.
        est = (2 * 512 * tk * 2 + 2 * tk * d_out * 2 + d_out * d_out * 2
               + 512 * d_out * 4 + 2 * 512 * d_out * 4)
        if est <= _KTILED_VMEM_BUDGET:
            return tk
    return 128


def prepare_image_projection_params(w1, b1, w2, b2, gamma, beta,
                                     *, force_k_tiled=False, tk_override=None):
    """Pre-materialize bf16 weights / padded w1 / packed biases ONCE.

    Doing this here (instead of inside the jitted call wrapper) removes a full
    weight-sized convert+pad HBM pass from every invocation.
    """
    d_in, d_out = w1.shape
    assert w2.shape == (d_out, d_out), (w2.shape, d_out)

    d_in128 = _round_up(d_in, 128)
    k_tiled = force_k_tiled or (d_in128 * d_out * 2 > _RESIDENT_W1_BUDGET)

    if k_tiled:
        tk = tk_override if tk_override is not None else _choose_tk(d_in, d_out)
        d_in_pad = _round_up(d_in, tk)
    else:
        tk = 0
        d_in_pad = d_in128

    w1_b = w1.astype(jnp.bfloat16)
    if d_in_pad != d_in:
        w1_b = jnp.pad(w1_b, ((0, d_in_pad - d_in), (0, 0)))
    w2_b = w2.astype(jnp.bfloat16)
    # b1 / b2 / gamma / beta packed into one (4, D_out) f32 operand.
    packed = jnp.stack([b1, b2, gamma, beta]).astype(jnp.float32)

    cfg = dict(d_in_pad=int(d_in_pad), tk=int(tk), k_tiled=bool(k_tiled))
    return (w1_b, w2_b, packed), cfg


# ---------------------------------------------------------------------------
# call path
# ---------------------------------------------------------------------------
@functools.partial(jax.jit, static_argnames=("d_in_pad", "tk", "k_tiled"))
def _image_projection_impl(x, w1_b, w2_b, params, *, d_in_pad, tk, k_tiled):
    B, d_in = x.shape
    d_out = params.shape[1]

    # ---- batch tile size -------------------------------------------------
    x_cols = tk if k_tiled else d_in_pad
    max_tm_by_vmem = max(16, (_X_TILE_BUDGET // max(1, x_cols * 2)) // 16 * 16)
    TM = min(512, max_tm_by_vmem, _round_up(B, 16))
    # v7x megacore: guarantee >= 2 tiles on the "parallel" batch axis when there
    # is enough work (no effect on single-TC v5e/v6e beyond one extra grid step).
    if B >= 64 and _round_up(B, TM) == TM:
        TM = _round_up(max(32, TM // 2), 16)
    B_pad = _round_up(B, TM)

    # ---- per-call input prep (x only; weights were prepared once) ---------
    xb = x.astype(jnp.bfloat16)
    if B_pad != B or d_in_pad != d_in:
        xb = jnp.pad(xb, ((0, B_pad - B), (0, d_in_pad - d_in)))

    # ---- VMEM working-set estimate; only raise the scoped limit if needed --
    if k_tiled:
        est = (2 * TM * tk * 2 + 2 * tk * d_out * 2 + 2 * d_out * d_out * 2
               + 2 * 4 * d_out * 4 + TM * d_out * 4 + 2 * TM * d_out * 4)
    else:
        est = (2 * TM * d_in_pad * 2 + 2 * d_in_pad * d_out * 2
               + 2 * d_out * d_out * 2 + 2 * 4 * d_out * 4 + 2 * TM * d_out * 4)
    vmem_kw = {}
    if est > 12 * 1024 * 1024:
        # Stay well under every generation's physical VMEM (64 MiB on v7x).
        vmem_kw["vmem_limit_bytes"] = min(int(est * 3 // 2), 48 * 1024 * 1024)
    # TODO(synk): for very large D_out on v7x, single-buffer the constant
    # operands (pipeline_mode=pl.Buffered(1)) and/or stream w2's contraction.

    if not k_tiled:
        # Fast path: whole layer in one grid step per batch tile; w1 resident.
        grid = (B_pad // TM,)
        out = pl.pallas_call(
            _fused_single_kernel,
            out_shape=jax.ShapeDtypeStruct((B_pad, d_out), jnp.float32),
            grid_spec=pltpu.PrefetchScalarGridSpec(
                num_scalar_prefetch=0,
                grid=grid,
                in_specs=[
                    pl.BlockSpec((TM, d_in_pad), lambda i: (i, 0)),     # x tile
                    pl.BlockSpec((d_in_pad, d_out), lambda i: (0, 0)),  # w1 (resident)
                    pl.BlockSpec((d_out, d_out), lambda i: (0, 0)),     # w2 (resident)
                    pl.BlockSpec((4, d_out), lambda i: (0, 0)),         # b1/b2/gamma/beta
                ],
                out_specs=pl.BlockSpec((TM, d_out), lambda i: (i, 0)),
            ),
            compiler_params=pltpu.CompilerParams(
                dimension_semantics=("parallel",), **vmem_kw),
        )(xb, w1_b, w2_b, params)
    else:
        # K-tiled path for large image_embedding_size.
        grid = (B_pad // TM, d_in_pad // tk)
        out = pl.pallas_call(
            _fused_ktiled_kernel,
            out_shape=jax.ShapeDtypeStruct((B_pad, d_out), jnp.float32),
            grid_spec=pltpu.PrefetchScalarGridSpec(
                num_scalar_prefetch=0,
                grid=grid,
                in_specs=[
                    pl.BlockSpec((TM, tk), lambda i, k: (i, k)),       # x tile
                    pl.BlockSpec((tk, d_out), lambda i, k: (k, 0)),    # w1 K-slice
                    pl.BlockSpec((d_out, d_out), lambda i, k: (0, 0)),  # w2 (resident)
                    pl.BlockSpec((4, d_out), lambda i, k: (0, 0)),     # b1/b2/gamma/beta
                ],
                out_specs=pl.BlockSpec((TM, d_out), lambda i, k: (i, 0)),
                scratch_shapes=[pltpu.VMEM((TM, d_out), jnp.float32)],  # f32 accumulator
            ),
            compiler_params=pltpu.CompilerParams(
                dimension_semantics=("parallel", "arbitrary"), **vmem_kw),
        )(xb, w1_b, w2_b, params)

    return out[:B]


def image_projection(image_embeddings, prepared):
    """Forward pass. `prepared` comes from prepare_image_projection_params()."""
    (w1_b, w2_b, packed), cfg = prepared
    if image_embeddings.ndim > 2:
        batch = image_embeddings.shape[0]
        image_embeddings = image_embeddings.reshape(batch, -1)
    return _image_projection_impl(
        image_embeddings, w1_b, w2_b, packed,
        d_in_pad=cfg["d_in_pad"], tk=cfg["tk"], k_tiled=cfg["k_tiled"])


def init_params(key, image_embedding_size, shared_embedding_size):
    k1, k2, k3, k4 = jax.random.split(key, 4)
    s1 = 1.0 / jnp.sqrt(image_embedding_size)
    s2 = 1.0 / jnp.sqrt(shared_embedding_size)
    w1 = jax.random.uniform(k1, (image_embedding_size, shared_embedding_size),
                            jnp.float32, -s1, s1)
    b1 = jax.random.uniform(k2, (shared_embedding_size,), jnp.float32, -s1, s1)
    w2 = jax.random.uniform(k3, (shared_embedding_size, shared_embedding_size),
                            jnp.float32, -s2, s2)
    b2 = jax.random.uniform(k4, (shared_embedding_size,), jnp.float32, -s2, s2)
    gamma = jnp.ones((shared_embedding_size,), jnp.float32)
    beta = jnp.zeros((shared_embedding_size,), jnp.float32)
    return w1, b1, w2, b2, gamma, beta


if __name__ == "__main__":
    key = jax.random.PRNGKey(0)
    kx, kp = jax.random.split(key)

    # Image-like input (B, C, H, W) -> flattened to (B, C*H*W) like .view(batch, -1).
    B, C, H, W = 2, 4, 16, 16
    image_embedding_size = C * H * W      # 1024
    shared_embedding_size = 128

    x = jax.random.normal(kx, (B, C, H, W), jnp.float32)
    w1, b1, w2, b2, gamma, beta = init_params(kp, image_embedding_size,
                                              shared_embedding_size)

    # Pure-JAX reference with the same bf16 matmul inputs / f32 accumulation.
    xf = x.reshape(B, -1)
    xb = xf.astype(jnp.bfloat16).astype(jnp.float32)
    w1b = w1.astype(jnp.bfloat16).astype(jnp.float32)
    w2b = w2.astype(jnp.bfloat16).astype(jnp.float32)
    proj = xb @ w1b + b1
    h = 0.5 * proj * (1.0 + lax.erf(proj * INV_SQRT2))
    y = h.astype(jnp.bfloat16).astype(jnp.float32) @ w2b + b2
    z = y + proj
    mu = z.mean(-1, keepdims=True)
    var = ((z - mu) ** 2).mean(-1, keepdims=True)
    ref = (z - mu) / jnp.sqrt(var + LAYERNORM_EPS) * gamma + beta

    # Fast path: w1 fully VMEM-resident, no K grid axis, no accumulator.
    prepared = prepare_image_projection_params(w1, b1, w2, b2, gamma, beta)
    out = image_projection(x, prepared)
    jax.block_until_ready(out)
    assert out.shape == (B, shared_embedding_size)
    assert jnp.allclose(out, ref, atol=2e-2, rtol=2e-2), \
        float(jnp.max(jnp.abs(out - ref)))

    # K-tiled fallback (auto-selected for large image_embedding_size); forced here
    # with tk=512 (2 K steps) to cover the accumulate path too.
    prepared_kt = prepare_image_projection_params(
        w1, b1, w2, b2, gamma, beta, force_k_tiled=True, tk_override=512)
    out_kt = image_projection(x, prepared_kt)
    jax.block_until_ready(out_kt)
    assert jnp.allclose(out_kt, ref, atol=2e-2, rtol=2e-2), \
        float(jnp.max(jnp.abs(out_kt - ref)))

    print("KERNEL_OK")
</pallas_src>

<mosaic_0001>
module attributes {stable_mosaic.version = 11 : i64} {
  func.func @_fused_single_kernel(%arg0: i32, %arg1: memref<16x1024xbf16, #tpu.memory_space<vmem>>, %arg2: memref<1024x128xbf16, #tpu.memory_space<vmem>>, %arg3: memref<128x128xbf16, #tpu.memory_space<vmem>>, %arg4: memref<4x128xf32, #tpu.memory_space<vmem>>, %arg5: memref<16x128xf32, #tpu.memory_space<vmem>>) attributes {dimension_semantics = [#tpu.dimension_semantics<parallel>], iteration_bounds = array<i64: 1>, scalar_prefetch = 0 : i64, scratch_operands = 0 : i64, tpu.core_type = #tpu.core_type<tc>, window_params = [{transform_indices = @transform_0, window_bounds = array<i64: 16, 1024>}, {pipeline_mode = #tpu.pipeline_mode<synchronous>, transform_indices = @transform_1, window_bounds = array<i64: 1024, 128>}, {pipeline_mode = #tpu.pipeline_mode<synchronous>, transform_indices = @transform_2, window_bounds = array<i64: 128, 128>}, {pipeline_mode = #tpu.pipeline_mode<synchronous>, transform_indices = @transform_3, window_bounds = array<i64: 4, 128>}, {transform_indices = @transform_4, window_bounds = array<i64: 16, 128>}]} {
    %c0 = arith.constant 0 : index
    %c0_0 = arith.constant 0 : index
    %0 = vector.load %arg1[%c0, %c0_0] : memref<16x1024xbf16, #tpu.memory_space<vmem>>, vector<16x1024xbf16>
    %c0_1 = arith.constant 0 : index
    %c0_2 = arith.constant 0 : index
    %1 = vector.load %arg2[%c0_1, %c0_2] : memref<1024x128xbf16, #tpu.memory_space<vmem>>, vector<1024x128xbf16>
    %cst = arith.constant dense<0.000000e+00> : vector<16x128xf32>
    %2 = tpu.matmul %0, %1, %cst {dimension_numbers = #tpu.dot_dimension_numbers<[1], [0], [0], [1], [0, 0, 1, 1], [], []>} : vector<16x1024xbf16>, vector<1024x128xbf16>, vector<16x128xf32> -> vector<16x128xf32>
    %c0_3 = arith.constant 0 : index
    %c0_4 = arith.constant 0 : index
    %3 = vector.load %arg4[%c0_3, %c0_4] : memref<4x128xf32, #tpu.memory_space<vmem>>, vector<1x128xf32>
    %c1 = arith.constant 1 : index
    %c0_5 = arith.constant 0 : index
    %4 = vector.load %arg4[%c1, %c0_5] : memref<4x128xf32, #tpu.memory_space<vmem>>, vector<1x128xf32>
    %c2 = arith.constant 2 : index
    %c0_6 = arith.constant 0 : index
    %5 = vector.load %arg4[%c2, %c0_6] : memref<4x128xf32, #tpu.memory_space<vmem>>, vector<1x128xf32>
    %c3 = arith.constant 3 : index
    %c0_7 = arith.constant 0 : index
    %6 = vector.load %arg4[%c3, %c0_7] : memref<4x128xf32, #tpu.memory_space<vmem>>, vector<1x128xf32>
    %7 = vector.broadcast %3 : vector<1x128xf32> to vector<16x128xf32>
    %8 = arith.addf %2, %7 : vector<16x128xf32>
    %cst_8 = arith.constant 5.000000e-01 : f32
    %9 = vector.broadcast %cst_8 : f32 to vector<16x128xf32>
    %10 = arith.mulf %9, %8 : vector<16x128xf32>
    %cst_9 = arith.constant 0.707106769 : f32
    %11 = vector.broadcast %cst_9 : f32 to vector<16x128xf32>
    %12 = arith.mulf %8, %11 : vector<16x128xf32>
    %13 = math.erf %12 : vector<16x128xf32>
    %cst_10 = arith.constant 1.000000e+00 : f32
    %14 = vector.broadcast %cst_10 : f32 to vector<16x128xf32>
    %15 = arith.addf %14, %13 : vector<16x128xf32>
    %16 = arith.mulf %10, %15 : vector<16x128xf32>
    %17 = arith.truncf %16 : vector<16x128xf32> to vector<16x128xbf16>
    %c0_11 = arith.constant 0 : index
    %c0_12 = arith.constant 0 : index
    %18 = vector.load %arg3[%c0_11, %c0_12] : memref<128x128xbf16, #tpu.memory_space<vmem>>, vector<128x128xbf16>
    %cst_13 = arith.constant dense<0.000000e+00> : vector<16x128xf32>
    %19 = tpu.matmul %17, %18, %cst_13 {dimension_numbers = #tpu.dot_dimension_numbers<[1], [0], [0], [1], [0, 0, 1, 1], [], []>} : vector<16x128xbf16>, vector<128x128xbf16>, vector<16x128xf32> -> vector<16x128xf32>
    %20 = vector.broadcast %4 : vector<1x128xf32> to vector<16x128xf32>
    %21 = arith.addf %19, %20 : vector<16x128xf32>
    %22 = arith.addf %21, %8 : vector<16x128xf32>
    %cst_14 = arith.constant dense<0.000000e+00> : vector<16xf32>
    %23 = vector.multi_reduction <add>, %22, %cst_14 [1] : vector<16x128xf32> to vector<16xf32>
    %24 = vector.shape_cast %23 : vector<16xf32> to vector<16x1xf32>
    %cst_15 = arith.constant 1.280000e+02 : f32
    %25 = vector.broadcast %cst_15 : f32 to vector<16x1xf32>
    %26 = arith.divf %24, %25 : vector<16x1xf32>
    %27 = vector.broadcast %26 : vector<16x1xf32> to vector<16x128xf32>
    %28 = arith.subf %22, %27 : vector<16x128xf32>
    %29 = arith.mulf %28, %28 : vector<16x128xf32>
    %cst_16 = arith.constant dense<0.000000e+00> : vector<16xf32>
    %30 = vector.multi_reduction <add>, %29, %cst_16 [1] : vector<16x128xf32> to vector<16xf32>
    %31 = vector.shape_cast %30 : vector<16xf32> to vector<16x1xf32>
    %cst_17 = arith.constant 1.280000e+02 : f32
    %32 = vector.broadcast %cst_17 : f32 to vector<16x1xf32>
    %33 = arith.divf %31, %32 : vector<16x1xf32>
    %cst_18 = arith.constant 9.99999974E-6 : f32
    %34 = vector.broadcast %cst_18 : f32 to vector<16x1xf32>
    %35 = arith.addf %33, %34 : vector<16x1xf32>
    %36 = math.rsqrt %35 : vector<16x1xf32>
    %37 = vector.broadcast %36 : vector<16x1xf32> to vector<16x128xf32>
    %38 = arith.mulf %28, %37 : vector<16x128xf32>
    %39 = vector.broadcast %5 : vector<1x128xf32> to vector<16x128xf32>
    %40 = arith.mulf %38, %39 : vector<16x128xf32>
    %41 = vector.broadcast %6 : vector<1x128xf32> to vector<16x128xf32>
    %42 = arith.addf %40, %41 : vector<16x128xf32>
    %c0_19 = arith.constant 0 : index
    %c0_20 = arith.constant 0 : index
    %43 = vector.load %arg5[%c0_19, %c0_20] : memref<16x128xf32, #tpu.memory_space<vmem>>, vector<16x128xf32>
    tpu.vector_store %arg5[%c0_19, %c0_20], %42 {strides = array<i32>} : memref<16x128xf32, #tpu.memory_space<vmem>>, vector<16x128xf32>,
    return
  }
  func.func @transform_0(%arg0: i32) -> (i32, i32) {
    %c0_i32 = arith.constant 0 : i32
    %c0_i32_0 = arith.constant 0 : i32
    return %arg0, %c0_i32 : i32, i32
  }
  func.func @transform_1(%arg0: i32) -> (i32, i32) {
    %c0_i32 = arith.constant 0 : i32
    %c0_i32_0 = arith.constant 0 : i32
    %c0_i32_1 = arith.constant 0 : i32
    return %c0_i32, %c0_i32_0 : i32, i32
  }
  func.func @transform_2(%arg0: i32) -> (i32, i32) {
    %c0_i32 = arith.constant 0 : i32
    %c0_i32_0 = arith.constant 0 : i32
    %c0_i32_1 = arith.constant 0 : i32
    return %c0_i32, %c0_i32_0 : i32, i32
  }
  func.func @transform_3(%arg0: i32) -> (i32, i32) {
    %c0_i32 = arith.constant 0 : i32
    %c0_i32_0 = arith.constant 0 : i32
    %c0_i32_1 = arith.constant 0 : i32
    return %c0_i32, %c0_i32_0 : i32, i32
  }
  func.func @transform_4(%arg0: i32) -> (i32, i32) {
    %c0_i32 = arith.constant 0 : i32
    %c0_i32_0 = arith.constant 0 : i32
    return %arg0, %c0_i32 : i32, i32
  }
}

</mosaic_0001>

<llo_original>
// kernel: _image_projection_impl.1
$region0: #{_image_projection_impl.1}
  #allocation0 [shape = 'u32[]', space=smem, size = 0x4, offset = 0x4, fixed_abs, tag = 'smem constant byte address 0x4 - core index']
  #allocation1 [shape = 'u32[144,128]{1,0:T(1,128)}', space=vmem, size = 0x12000, scoped, tag = 'internal scratch']
  %s0 = inlined_call_operand.vmem [shape: bf16[16,1024], index: 0, kind: input, shape index: {}]
  %s1 = inlined_call_operand.hbm [shape: bf16[1024,128], index: 1, kind: input, shape index: {}]
  %s2 = inlined_call_operand.vmem [shape: bf16[128,128], index: 2, kind: input, shape index: {}]
  %s3 = inlined_call_operand.vmem [shape: f32[4,128], index: 3, kind: input, shape index: {}]
  %s4 = inlined_call_operand.vmem [shape: f32[16,128], index: 4, kind: output, shape index: {}]
  %s5 = sld [smem:[#allocation0]]
  $region30: #{_image_projection_impl.1} parent=0
    _
  %s7 = ssub.s32 1, %s5
  %s8 = scalar_select 0, %s7, %s5
  $region1: #{_image_projection_impl.1} parent=0
    #allocation2 [shape = 'u8[262144]{0}', space=vmem, size = 0x40000, scoped, tag = 'input window, operand 1, single buffered']
    #allocation3 [shape = 's32[1]{0}', space=sflag, size = 0x4, scoped, tag = 'scoped memory for _image_projection_impl.1']
    %9 = vsyncpa [#allocation3], 0
    // Predicated region
    $region2: #{_image_projection_impl.1} parent=1 // pred_check
      _
    $region3: #{_image_projection_impl.1} parent=1 // pred_check_branch
      %11 = sbr.rel (0) target = $region5
    $region4: #{_image_projection_impl.1} parent=1 // pred_region
      _
    $region5: #{_image_projection_impl.1} parent=1 // pred_fallthru
      _
    // Predicated region
    $region6: #{_image_projection_impl.1} parent=1 // pred_check
      _
    $region7: #{_image_projection_impl.1} parent=1 // pred_check_branch
      %13 = sbr.rel (0) target = $region9
    $region8: #{_image_projection_impl.1} parent=1 // pred_region
      %s15 = ssub.s32 8192, 8192
      %16 = vsyncadd [#allocation3], %s15
      %s17 = sshll.u32 [#allocation2], 4
      %s18 = int_to_ptr.vmem [resolvable:$true] %s17
      %23 = dma.hbm_to_vmem [thread:$0]  %s1, 8192, %s18, [#allocation3], 64, 64, 4
    $region9: #{_image_projection_impl.1} parent=1 // pred_fallthru
      _
    // Predicated region
    $region10: #{_image_projection_impl.1} parent=1 // pred_check
      _
    $region11: #{_image_projection_impl.1} parent=1 // pred_check_branch
      %25 = sbr.rel (0) target = $region13
    $region12: #{_image_projection_impl.1} parent=1 // pred_region
      _
    $region13: #{_image_projection_impl.1} parent=1 // pred_fallthru
      _
    // Predicated region
    $region14: #{_image_projection_impl.1} parent=1 // pred_check
      _
    $region15: #{_image_projection_impl.1} parent=1 // pred_check_branch
      %27 = sbr.rel (0) target = $region17
    $region16: #{_image_projection_impl.1} parent=1 // pred_region
      _
    $region17: #{_image_projection_impl.1} parent=1 // pred_fallthru
      _
    // Predicated region
    $region18: #{_image_projection_impl.1} parent=1 // pred_check
      _
    $region19: #{_image_projection_impl.1} parent=1 // pred_check_branch
      %29 = sbr.rel (0) target = $region21
    $region20: #{_image_projection_impl.1} parent=1 // pred_region
      %30 = dma.done [#allocation3], 8192
    $region21: #{_image_projection_impl.1} parent=1 // pred_fallthru
      _
    %v32 = vld [vmem:[%s0] sm:$0xff]
    %v33 = vld [vmem:[%s0 + $0x8] sm:$0xff]
    %v34 = vld [vmem:[%s0 + $0x10] sm:$0xff]
    %v35 = vld [vmem:[%s0 + $0x18] sm:$0xff]
    %v36 = vld [vmem:[%s0 + $0x20] sm:$0xff]
    %v37 = vld [vmem:[%s0 + $0x28] sm:$0xff]
    %v38 = vld [vmem:[%s0 + $0x30] sm:$0xff]
    %v39 = vld [vmem:[%s0 + $0x38] sm:$0xff]
    %v40 = vld [vmem:[#allocation2] sm:$0xf]
    %v41 = vld [vmem:[#allocation2 + $0x4] sm:$0xf]
    %v42 = vld [vmem:[#allocation2 + $0x8] sm:$0xf]
    %v43 = vld [vmem:[#allocation2 + $0xc] sm:$0xf]
    %v44 = vld [vmem:[#allocation2 + $0x10] sm:$0xf]
    %v45 = vld [vmem:[#allocation2 + $0x14] sm:$0xf]
    %v46 = vld [vmem:[#allocation2 + $0x18] sm:$0xf]
    %v47 = vld [vmem:[#allocation2 + $0x1c] sm:$0xf]
    %v48 = vld [vmem:[#allocation2 + $0x20] sm:$0xf]
    %v49 = vld [vmem:[#allocation2 + $0x24] sm:$0xf]
    %v50 = vld [vmem:[#allocation2 + $0x28] sm:$0xf]
    %v51 = vld [vmem:[#allocation2 + $0x2c] sm:$0xf]
    %v52 = vld [vmem:[#allocation2 + $0x30] sm:$0xf]
    %v53 = vld [vmem:[#allocation2 + $0x34] sm:$0xf]
    %v54 = vld [vmem:[#allocation2 + $0x38] sm:$0xf]
    %v55 = vld [vmem:[#allocation2 + $0x3c] sm:$0xf]
    %v56 = vld [vmem:[#allocation2 + $0x40] sm:$0xf]
    %v57 = vld [vmem:[#allocation2 + $0x44] sm:$0xf]
    %v58 = vld [vmem:[#allocation2 + $0x48] sm:$0xf]
    %v59 = vld [vmem:[#allocation2 + $0x4c] sm:$0xf]
    %v60 = vld [vmem:[#allocation2 + $0x50] sm:$0xf]
    %v61 = vld [vmem:[#allocation2 + $0x54] sm:$0xf]
    %v62 = vld [vmem:[#allocation2 + $0x58] sm:$0xf]
    %v63 = vld [vmem:[#allocation2 + $0x5c] sm:$0xf]
    %v64 = vld [vmem:[#allocation2 + $0x60] sm:$0xf]
    %v65 = vld [vmem:[#allocation2 + $0x64] sm:$0xf]
    %v66 = vld [vmem:[#allocation2 + $0x68] sm:$0xf]
    %v67 = vld [vmem:[#allocation2 + $0x6c] sm:$0xf]
    %v68 = vld [vmem:[#allocation2 + $0x70] sm:$0xf]
    %v69 = vld [vmem:[#allocation2 + $0x74] sm:$0xf]
    %v70 = vld [vmem:[#allocation2 + $0x78] sm:$0xf]
    %v71 = vld [vmem:[#allocation2 + $0x7c] sm:$0xf]
    %v72 = vld [vmem:[#allocation2 + $0x80] sm:$0xf]
    %v73 = vld [vmem:[#allocation2 + $0x84] sm:$0xf]
    %v74 = vld [vmem:[#allocation2 + $0x88] sm:$0xf]
    %v75 = vld [vmem:[#allocation2 + $0x8c] sm:$0xf]
    %v76 = vld [vmem:[#allocation2 + $0x90] sm:$0xf]
    %v77 = vld [vmem:[#allocation2 + $0x94] sm:$0xf]
    %v78 = vld [vmem:[#allocation2 + $0x98] sm:$0xf]
    %v79 = vld [vmem:[#allocation2 + $0x9c] sm:$0xf]
    %v80 = vld [vmem:[#allocation2 + $0xa0] sm:$0xf]
    %v81 = vld [vmem:[#allocation2 + $0xa4] sm:$0xf]
    %v82 = vld [vmem:[#allocation2 + $0xa8] sm:$0xf]
    %v83 = vld [vmem:[#allocation2 + $0xac] sm:$0xf]
    %v84 = vld [vmem:[#allocation2 + $0xb0] sm:$0xf]
    %v85 = vld [vmem:[#allocation2 + $0xb4] sm:$0xf]
    %v86 = vld [vmem:[#allocation2 + $0xb8] sm:$0xf]
    %v87 = vld [vmem:[#allocation2 + $0xbc] sm:$0xf]
    %v88 = vld [vmem:[#allocation2 + $0xc0] sm:$0xf]
    %v89 = vld [vmem:[#allocation2 + $0xc4] sm:$0xf]
    %v90 = vld [vmem:[#allocation2 + $0xc8] sm:$0xf]
    %v91 = vld [vmem:[#allocation2 + $0xcc] sm:$0xf]
    %v92 = vld [vmem:[#allocation2 + $0xd0] sm:$0xf]
    %v93 = vld [vmem:[#allocation2 + $0xd4] sm:$0xf]
    %v94 = vld [vmem:[#allocation2 + $0xd8] sm:$0xf]
    %v95 = vld [vmem:[#allocation2 + $0xdc] sm:$0xf]
    %v96 = vld [vmem:[#allocation2 + $0xe0] sm:$0xf]
    %v97 = vld [vmem:[#allocation2 + $0xe4] sm:$0xf]
    %v98 = vld [vmem:[#allocation2 + $0xe8] sm:$0xf]
    %v99 = vld [vmem:[#allocation2 + $0xec] sm:$0xf]
    %v100 = vld [vmem:[#allocation2 + $0xf0] sm:$0xf]
    %v101 = vld [vmem:[#allocation2 + $0xf4] sm:$0xf]
    %v102 = vld [vmem:[#allocation2 + $0xf8] sm:$0xf]
    %v103 = vld [vmem:[#allocation2 + $0xfc] sm:$0xf]
    %v104 = vld [vmem:[#allocation2 + $0x100] sm:$0xf]
    %v105 = vld [vmem:[#allocation2 + $0x104] sm:$0xf]
    %v106 = vld [vmem:[#allocation2 + $0x108] sm:$0xf]
    %v107 = vld [vmem:[#allocation2 + $0x10c] sm:$0xf]
    %v108 = vld [vmem:[#allocation2 + $0x110] sm:$0xf]
    %v109 = vld [vmem:[#allocation2 + $0x114] sm:$0xf]
    %v110 = vld [vmem:[#allocation2 + $0x118] sm:$0xf]
    %v111 = vld [vmem:[#allocation2 + $0x11c] sm:$0xf]
    %v112 = vld [vmem:[#allocation2 + $0x120] sm:$0xf]
    %v113 = vld [vmem:[#allocation2 + $0x124] sm:$0xf]
    %v114 = vld [vmem:[#allocation2 + $0x128] sm:$0xf]
    %v115 = vld [vmem:[#allocation2 + $0x12c] sm:$0xf]
    %v116 = vld [vmem:[#allocation2 + $0x130] sm:$0xf]
    %v117 = vld [vmem:[#allocation2 + $0x134] sm:$0xf]
    %v118 = vld [vmem:[#allocation2 + $0x138] sm:$0xf]
    %v119 = vld [vmem:[#allocation2 + $0x13c] sm:$0xf]
    %v120 = vld [vmem:[#allocation2 + $0x140] sm:$0xf]
    %v121 = vld [vmem:[#allocation2 + $0x144] sm:$0xf]
    %v122 = vld [vmem:[#allocation2 + $0x148] sm:$0xf]
    %v123 = vld [vmem:[#allocation2 + $0x14c] sm:$0xf]
    %v124 = vld [vmem:[#allocation2 + $0x150] sm:$0xf]
    %v125 = vld [vmem:[#allocation2 + $0x154] sm:$0xf]
    %v126 = vld [vmem:[#allocation2 + $0x158] sm:$0xf]
    %v127 = vld [vmem:[#allocation2 + $0x15c] sm:$0xf]
    %v128 = vld [vmem:[#allocation2 + $0x160] sm:$0xf]
    %v129 = vld [vmem:[#allocation2 + $0x164] sm:$0xf]
    %v130 = vld [vmem:[#allocation2 + $0x168] sm:$0xf]
    %v131 = vld [vmem:[#allocation2 + $0x16c] sm:$0xf]
    %v132 = vld [vmem:[#allocation2 + $0x170] sm:$0xf]
    %v133 = vld [vmem:[#allocation2 + $0x174] sm:$0xf]
    %v134 = vld [vmem:[#allocation2 + $0x178] sm:$0xf]
    %v135 = vld [vmem:[#allocation2 + $0x17c] sm:$0xf]
    %v136 = vld [vmem:[#allocation2 + $0x180] sm:$0xf]
    %v137 = vld [vmem:[#allocation2 + $0x184] sm:$0xf]
    %v138 = vld [vmem:[#allocation2 + $0x188] sm:$0xf]
    %v139 = vld [vmem:[#allocation2 + $0x18c] sm:$0xf]
    %v140 = vld [vmem:[#allocation2 + $0x190] sm:$0xf]
    %v141 = vld [vmem:[#allocation2 + $0x194] sm:$0xf]
    %v142 = vld [vmem:[#allocation2 + $0x198] sm:$0xf]
    %v143 = vld [vmem:[#allocation2 + $0x19c] sm:$0xf]
    %v144 = vld [vmem:[#allocation2 + $0x1a0] sm:$0xf]
    %v145 = vld [vmem:[#allocation2 + $0x1a4] sm:$0xf]
    %v146 = vld [vmem:[#allocation2 + $0x1a8] sm:$0xf]
    %v147 = vld [vmem:[#allocation2 + $0x1ac] sm:$0xf]
    %v148 = vld [vmem:[#allocation2 + $0x1b0] sm:$0xf]
    %v149 = vld [vmem:[#allocation2 + $0x1b4] sm:$0xf]
    %v150 = vld [vmem:[#allocation2 + $0x1b8] sm:$0xf]
    %v151 = vld [vmem:[#allocation2 + $0x1bc] sm:$0xf]
    %v152 = vld [vmem:[#allocation2 + $0x1c0] sm:$0xf]
    %v153 = vld [vmem:[#allocation2 + $0x1c4] sm:$0xf]
    %v154 = vld [vmem:[#allocation2 + $0x1c8] sm:$0xf]
    %v155 = vld [vmem:[#allocation2 + $0x1cc] sm:$0xf]
    %v156 = vld [vmem:[#allocation2 + $0x1d0] sm:$0xf]
    %v157 = vld [vmem:[#allocation2 + $0x1d4] sm:$0xf]
    %v158 = vld [vmem:[#allocation2 + $0x1d8] sm:$0xf]
    %v159 = vld [vmem:[#allocation2 + $0x1dc] sm:$0xf]
    %v160 = vld [vmem:[#allocation2 + $0x1e0] sm:$0xf]
    %v161 = vld [vmem:[#allocation2 + $0x1e4] sm:$0xf]
    %v162 = vld [vmem:[#allocation2 + $0x1e8] sm:$0xf]
    %v163 = vld [vmem:[#allocation2 + $0x1ec] sm:$0xf]
    %v164 = vld [vmem:[#allocation2 + $0x1f0] sm:$0xf]
    %v165 = vld [vmem:[#allocation2 + $0x1f4] sm:$0xf]
    %v166 = vld [vmem:[#allocation2 + $0x1f8] sm:$0xf]
    %v167 = vld [vmem:[#allocation2 + $0x1fc] sm:$0xf]
    %v168 = vld [vmem:[%s3] sm:$0x1]
    %v169 = vld [vmem:[%s3 + $0x1] sm:$0x1]
    %v170 = vld [vmem:[%s3 + $0x2] sm:$0x1]
    %v171 = vld [vmem:[%s3 + $0x3] sm:$0x1]
    %v172 = vlaneseq
    %v173 = vshrl.u32 %v172, 7
    %v174 = vsub.s32 0, %v173
    %v175 = vrot.slane %v168, %v174
    %v184 = vunpack.c.l.b16 %v32
    %v185 = vunpack.c.h.b16 %v32
    %v186 = vunpack.c.l.b16 %v33
    %v187 = vunpack.c.h.b16 %v33
    %v188 = vunpack.c.l.b16 %v34
    %v189 = vunpack.c.h.b16 %v34
    %v190 = vunpack.c.l.b16 %v35
    %v191 = vunpack.c.h.b16 %v35
    %v192 = vunpack.c.l.b16 %v36
    %v193 = vunpack.c.h.b16 %v36
    %v194 = vunpack.c.l.b16 %v37
    %v195 = vunpack.c.h.b16 %v37
    %v196 = vunpack.c.l.b16 %v38
    %v197 = vunpack.c.h.b16 %v38
    %v198 = vunpack.c.l.b16 %v39
    %v199 = vunpack.c.h.b16 %v39
    %v200 = vpack.c.b16 %v192, %v184
    %v201 = vpack.c.b16 %v193, %v185
    %v202 = vpack.c.b16 %v194, %v186
    %v203 = vpack.c.b16 %v195, %v187
    %v204 = vpack.c.b16 %v196, %v188
    %v205 = vpack.c.b16 %v197, %v189
    %v206 = vpack.c.b16 %v198, %v190
    %v207 = vpack.c.b16 %v199, %v191
    %v344 = vunpack.c.l.b16 %v40
    %v345 = vunpack.c.l.b16 %v41
    %v346 = vunpack.c.l.b16 %v42
    %v347 = vunpack.c.l.b16 %v43
    %v348 = vunpack.c.l.b16 %v44
    %v349 = vunpack.c.l.b16 %v45
    %v350 = vunpack.c.l.b16 %v46
    %v351 = vunpack.c.l.b16 %v47
    %v352 = vunpack.c.l.b16 %v48
    %v353 = vunpack.c.l.b16 %v49
    %v354 = vunpack.c.l.b16 %v50
    %v355 = vunpack.c.l.b16 %v51
    %v356 = vunpack.c.l.b16 %v52
    %v357 = vunpack.c.l.b16 %v53
    %v358 = vunpack.c.l.b16 %v54
    %v359 = vunpack.c.l.b16 %v55
    %v360 = vunpack.c.l.b16 %v56
    %v361 = vunpack.c.l.b16 %v57
    %v362 = vunpack.c.l.b16 %v58
    %v363 = vunpack.c.l.b16 %v59
    %v364 = vunpack.c.l.b16 %v60
    %v365 = vunpack.c.l.b16 %v61
    %v366 = vunpack.c.l.b16 %v62
    %v367 = vunpack.c.l.b16 %v63
    %v368 = vunpack.c.l.b16 %v64
    %v369 = vunpack.c.l.b16 %v65
    %v370 = vunpack.c.l.b16 %v66
    %v371 = vunpack.c.l.b16 %v67
    %v372 = vunpack.c.l.b16 %v68
    %v373 = vunpack.c.l.b16 %v69
    %v374 = vunpack.c.l.b16 %v70
    %v375 = vunpack.c.l.b16 %v71
    %v376 = vunpack.c.l.b16 %v72
    %v377 = vunpack.c.l.b16 %v73
    %v378 = vunpack.c.l.b16 %v74
    %v379 = vunpack.c.l.b16 %v75
    %v380 = vunpack.c.l.b16 %v76
    %v381 = vunpack.c.l.b16 %v77
    %v382 = vunpack.c.l.b16 %v78
    %v383 = vunpack.c.l.b16 %v79
    %v384 = vunpack.c.l.b16 %v80
    %v385 = vunpack.c.l.b16 %v81
    %v386 = vunpack.c.l.b16 %v82
    %v387 = vunpack.c.l.b16 %v83
    %v388 = vunpack.c.l.b16 %v84
    %v389 = vunpack.c.l.b16 %v85
    %v390 = vunpack.c.l.b16 %v86
    %v391 = vunpack.c.l.b16 %v87
    %v392 = vunpack.c.l.b16 %v88
    %v393 = vunpack.c.l.b16 %v89
    %v394 = vunpack.c.l.b16 %v90
    %v395 = vunpack.c.l.b16 %v91
    %v396 = vunpack.c.l.b16 %v92
    %v397 = vunpack.c.l.b16 %v93
    %v398 = vunpack.c.l.b16 %v94
    %v399 = vunpack.c.l.b16 %v95
    %v400 = vunpack.c.l.b16 %v96
    %v401 = vunpack.c.l.b16 %v97
    %v402 = vunpack.c.l.b16 %v98
    %v403 = vunpack.c.l.b16 %v99
    %v404 = vunpack.c.l.b16 %v100
    %v405 = vunpack.c.l.b16 %v101
    %v406 = vunpack.c.l.b16 %v102
    %v407 = vunpack.c.l.b16 %v103
    %v408 = vunpack.c.l.b16 %v104
    %v409 = vunpack.c.l.b16 %v105
    %v410 = vunpack.c.l.b16 %v106
    %v411 = vunpack.c.l.b16 %v107
    %v412 = vunpack.c.l.b16 %v108
    %v413 = vunpack.c.l.b16 %v109
    %v414 = vunpack.c.l.b16 %v110
    %v415 = vunpack.c.l.b16 %v111
    %v416 = vunpack.c.l.b16 %v112
    %v417 = vunpack.c.l.b16 %v113
    %v418 = vunpack.c.l.b16 %v114
    %v419 = vunpack.c.l.b16 %v115
    %v420 = vunpack.c.l.b16 %v116
    %v421 = vunpack.c.l.b16 %v117
    %v422 = vunpack.c.l.b16 %v118
    %v423 = vunpack.c.l.b16 %v119
    %v424 = vunpack.c.l.b16 %v120
    %v425 = vunpack.c.l.b16 %v121
    %v426 = vunpack.c.l.b16 %v122
    %v427 = vunpack.c.l.b16 %v123
    %v428 = vunpack.c.l.b16 %v124
    %v429 = vunpack.c.l.b16 %v125
    %v430 = vunpack.c.l.b16 %v126
    %v431 = vunpack.c.l.b16 %v127
    %v432 = vunpack.c.l.b16 %v128
    %v433 = vunpack.c.l.b16 %v129
    %v434 = vunpack.c.l.b16 %v130
    %v435 = vunpack.c.l.b16 %v131
    %v436 = vunpack.c.l.b16 %v132
    %v437 = vunpack.c.l.b16 %v133
    %v438 = vunpack.c.l.b16 %v134
    %v439 = vunpack.c.l.b16 %v135
    %v440 = vunpack.c.l.b16 %v136
    %v441 = vunpack.c.l.b16 %v137
    %v442 = vunpack.c.l.b16 %v138
    %v443 = vunpack.c.l.b16 %v139
    %v444 = vunpack.c.l.b16 %v140
    %v445 = vunpack.c.l.b16 %v141
    %v446 = vunpack.c.l.b16 %v142
    %v447 = vunpack.c.l.b16 %v143
    %v448 = vunpack.c.l.b16 %v144
    %v449 = vunpack.c.l.b16 %v145
    %v450 = vunpack.c.l.b16 %v146
    %v451 = vunpack.c.l.b16 %v147
    %v452 = vunpack.c.l.b16 %v148
    %v453 = vunpack.c.l.b16 %v149
    %v454 = vunpack.c.l.b16 %v150
    %v455 = vunpack.c.l.b16 %v151
    %v456 = vunpack.c.l.b16 %v152
    %v457 = vunpack.c.l.b16 %v153
    %v458 = vunpack.c.l.b16 %v154
    %v459 = vunpack.c.l.b16 %v155
    %v460 = vunpack.c.l.b16 %v156
    %v461 = vunpack.c.l.b16 %v157
    %v462 = vunpack.c.l.b16 %v158
    %v463 = vunpack.c.l.b16 %v159
    %v464 = vunpack.c.l.b16 %v160
    %v465 = vunpack.c.l.b16 %v161
    %v466 = vunpack.c.l.b16 %v162
    %v467 = vunpack.c.l.b16 %v163
    %v468 = vunpack.c.l.b16 %v164
    %v469 = vunpack.c.l.b16 %v165
    %v470 = vunpack.c.l.b16 %v166
    %v471 = vunpack.c.l.b16 %v167
    %v472 = vpack.c.b16 %v345, %v344
    %v473 = vpack.c.b16 %v347, %v346
    %v474 = vpack.c.b16 %v349, %v348
    %v475 = vpack.c.b16 %v351, %v350
    %v476 = vpack.c.b16 %v353, %v352
    %v477 = vpack.c.b16 %v355, %v354
    %v478 = vpack.c.b16 %v357, %v356
    %v479 = vpack.c.b16 %v359, %v358
    %v480 = vpack.c.b16 %v361, %v360
    %v481 = vpack.c.b16 %v363, %v362
    %v482 = vpack.c.b16 %v365, %v364
    %v483 = vpack.c.b16 %v367, %v366
    %v484 = vpack.c.b16 %v369, %v368
    %v485 = vpack.c.b16 %v371, %v370
    %v486 = vpack.c.b16 %v373, %v372
    %v487 = vpack.c.b16 %v375, %v374
    %v488 = vpack.c.b16 %v377, %v376
    %v489 = vpack.c.b16 %v379, %v378
    %v490 = vpack.c.b16 %v381, %v380
    %v491 = vpack.c.b16 %v383, %v382
    %v492 = vpack.c.b16 %v385, %v384
    %v493 = vpack.c.b16 %v387, %v386
    %v494 = vpack.c.b16 %v389, %v388
    %v495 = vpack.c.b16 %v391, %v390
    %v496 = vpack.c.b16 %v393, %v392
    %v497 = vpack.c.b16 %v395, %v394
    %v498 = vpack.c.b16 %v397, %v396
    %v499 = vpack.c.b16 %v399, %v398
    %v500 = vpack.c.b16 %v401, %v400
    %v501 = vpack.c.b16 %v403, %v402
    %v502 = vpack.c.b16 %v405, %v404
    %v503 = vpack.c.b16 %v407, %v406
    %v504 = vpack.c.b16 %v409, %v408
    %v505 = vpack.c.b16 %v411, %v410
    %v506 = vpack.c.b16 %v413, %v412
    %v507 = vpack.c.b16 %v415, %v414
    %v508 = vpack.c.b16 %v417, %v416
    %v509 = vpack.c.b16 %v419, %v418
    %v510 = vpack.c.b16 %v421, %v420
    %v511 = vpack.c.b16 %v423, %v422
    %v512 = vpack.c.b16 %v425, %v424
    %v513 = vpack.c.b16 %v427, %v426
    %v514 = vpack.c.b16 %v429, %v428
    %v515 = vpack.c.b16 %v431, %v430
    %v516 = vpack.c.b16 %v433, %v432
    %v517 = vpack.c.b16 %v435, %v434
    %v518 = vpack.c.b16 %v437, %v436
    %v519 = vpack.c.b16 %v439, %v438
    %v520 = vpack.c.b16 %v441, %v440
    %v521 = vpack.c.b16 %v443, %v442
    %v522 = vpack.c.b16 %v445, %v444
    %v523 = vpack.c.b16 %v447, %v446
    %v524 = vpack.c.b16 %v449, %v448
    %v525 = vpack.c.b16 %v451, %v450
    %v526 = vpack.c.b16 %v453, %v452
    %v527 = vpack.c.b16 %v455, %v454
    %v528 = vpack.c.b16 %v457, %v456
    %v529 = vpack.c.b16 %v459, %v458
    %v530 = vpack.c.b16 %v461, %v460
    %v531 = vpack.c.b16 %v463, %v462
    %v532 = vpack.c.b16 %v465, %v464
    %v533 = vpack.c.b16 %v467, %v466
    %v534 = vpack.c.b16 %v469, %v468
    %v535 = vpack.c.b16 %v471, %v470
    %600 = vmatprep.subr.bf16.mxu0 0
    %601 = vmatpush1.bf16.msra.mxu0 %v472
    %602 = vmatprep.subr.bf16.mxu0 0
    %603 = vmatpush1.bf16.msra.mxu0 %v473
    %604 = vmatprep.subr.bf16.mxu0 0
    %605 = vmatpush1.bf16.msra.mxu0 %v474
    %606 = vmatprep.subr.bf16.mxu0 0
    %607 = vmatpush1.bf16.msra.mxu0 %v475
    %608 = vmatprep.subr.bf16.mxu0 0
    %609 = vmatpush1.bf16.msra.mxu0 %v476
    %610 = vmatprep.subr.bf16.mxu0 0
    %611 = vmatpush1.bf16.msra.mxu0 %v477
    %612 = vmatprep.subr.bf16.mxu0 0
    %613 = vmatpush1.bf16.msra.mxu0 %v478
    %614 = vmatprep.subr.bf16.mxu0 0
    %615 = vmatpush1.bf16.msra.mxu0 %v479
    %616 = vmatprep.subr.bf16.mxu0 0
    %617 = vmatpush1.bf16.msra.mxu0 %v480
    %618 = vmatprep.subr.bf16.mxu0 0
    %619 = vmatpush1.bf16.msra.mxu0 %v481
    %620 = vmatprep.subr.bf16.mxu0 0
    %621 = vmatpush1.bf16.msra.mxu0 %v482
    %622 = vmatprep.subr.bf16.mxu0 0
    %623 = vmatpush1.bf16.msra.mxu0 %v483
    %624 = vmatprep.subr.bf16.mxu0 0
    %625 = vmatpush1.bf16.msra.mxu0 %v484
    %626 = vmatprep.subr.bf16.mxu0 0
    %627 = vmatpush1.bf16.msra.mxu0 %v485
    %628 = vmatprep.subr.bf16.mxu0 0
    %629 = vmatpush1.bf16.msra.mxu0 %v486
    %630 = vmatprep.subr.bf16.mxu0 0
    %631 = vmatpush1.bf16.msra.mxu0 %v487
    %632 = vmatprep.mubr.bf16.mxu0 %v201
    %633 = vmatmul.mubr.bf16.gmra.mrb[0].mxu0 %v200
    %v634 = vpop.f32.mrb[0].mxu0
    %v635 = vadd.f32 %v175, %v634
    %v636 = vpop.f32.mrb[0].mxu0
    %v637 = vpop.f32.mrb[0].mxu0
    %v638 = vadd.f32 %v175, %v637
    %v639 = vpop.f32.mrb[0].mxu0
    %640 = vdwg.mxu0
    %641 = vmatprep.subr.bf16.mxu0 0
    %642 = vmatpush1.bf16.msra.mxu0 %v488
    %643 = vmatprep.subr.bf16.mxu0 0
    %644 = vmatpush1.bf16.msra.mxu0 %v489
    %645 = vmatprep.subr.bf16.mxu0 0
    %646 = vmatpush1.bf16.msra.mxu0 %v490
    %647 = vmatprep.subr.bf16.mxu0 0
    %648 = vmatpush1.bf16.msra.mxu0 %v491
    %649 = vmatprep.subr.bf16.mxu0 0
    %650 = vmatpush1.bf16.msra.mxu0 %v492
    %651 = vmatprep.subr.bf16.mxu0 0
    %652 = vmatpush1.bf16.msra.mxu0 %v493
    %653 = vmatprep.subr.bf16.mxu0 0
    %654 = vmatpush1.bf16.msra.mxu0 %v494
    %655 = vmatprep.subr.bf16.mxu0 0
    %656 = vmatpush1.bf16.msra.mxu0 %v495
    %657 = vmatprep.subr.bf16.mxu0 0
    %658 = vmatpush1.bf16.msra.mxu0 %v496
    %659 = vmatprep.subr.bf16.mxu0 0
    %660 = vmatpush1.bf16.msra.mxu0 %v497
    %661 = vmatprep.subr.bf16.mxu0 0
    %662 = vmatpush1.bf16.msra.mxu0 %v498
    %663 = vmatprep.subr.bf16.mxu0 0
    %664 = vmatpush1.bf16.msra.mxu0 %v499
    %665 = vmatprep.subr.bf16.mxu0 0
    %666 = vmatpush1.bf16.msra.mxu0 %v500
    %667 = vmatprep.subr.bf16.mxu0 0
    %668 = vmatpush1.bf16.msra.mxu0 %v501
    %669 = vmatprep.subr.bf16.mxu0 0
    %670 = vmatpush1.bf16.msra.mxu0 %v502
    %671 = vmatprep.subr.bf16.mxu0 0
    %672 = vmatpush1.bf16.msra.mxu0 %v503
    %673 = vmatprep.mubr.bf16.mxu0 %v203
    %674 = vmatmul.mubr.bf16.gmra.mrb[0].mxu0 %v202
    %v675 = vpop.f32.mrb[0].mxu0
    %v676 = vadd.f32 %v635, %v675
    %v677 = vpop.f32.mrb[0].mxu0
    %v678 = vpop.f32.mrb[0].mxu0
    %v679 = vadd.f32 %v638, %v678
    %v680 = vpop.f32.mrb[0].mxu0
    %681 = vdwg.mxu0
    %682 = vmatprep.subr.bf16.mxu0 0
    %683 = vmatpush1.bf16.msra.mxu0 %v504
    %684 = vmatprep.subr.bf16.mxu0 0
    %685 = vmatpush1.bf16.msra.mxu0 %v505
    %686 = vmatprep.subr.bf16.mxu0 0
    %687 = vmatpush1.bf16.msra.mxu0 %v506
    %688 = vmatprep.subr.bf16.mxu0 0
    %689 = vmatpush1.bf16.msra.mxu0 %v507
    %690 = vmatprep.subr.bf16.mxu0 0
    %691 = vmatpush1.bf16.msra.mxu0 %v508
    %692 = vmatprep.subr.bf16.mxu0 0
    %693 = vmatpush1.bf16.msra.mxu0 %v509
    %694 = vmatprep.subr.bf16.mxu0 0
    %695 = vmatpush1.bf16.msra.mxu0 %v510
    %696 = vmatprep.subr.bf16.mxu0 0
    %697 = vmatpush1.bf16.msra.mxu0 %v511
    %698 = vmatprep.subr.bf16.mxu0 0
    %699 = vmatpush1.bf16.msra.mxu0 %v512
    %700 = vmatprep.subr.bf16.mxu0 0
    %701 = vmatpush1.bf16.msra.mxu0 %v513
    %702 = vmatprep.subr.bf16.mxu0 0
    %703 = vmatpush1.bf16.msra.mxu0 %v514
    %704 = vmatprep.subr.bf16.mxu0 0
    %705 = vmatpush1.bf16.msra.mxu0 %v515
    %706 = vmatprep.subr.bf16.mxu0 0
    %707 = vmatpush1.bf16.msra.mxu0 %v516
    %708 = vmatprep.subr.bf16.mxu0 0
    %709 = vmatpush1.bf16.msra.mxu0 %v517
    %710 = vmatprep.subr.bf16.mxu0 0
    %711 = vmatpush1.bf16.msra.mxu0 %v518
    %712 = vmatprep.subr.bf16.mxu0 0
    %713 = vmatpush1.bf16.msra.mxu0 %v519
    %714 = vmatprep.mubr.bf16.mxu0 %v205
    %715 = vmatmul.mubr.bf16.gmra.mrb[0].mxu0 %v204
    %v716 = vpop.f32.mrb[0].mxu0
    %v717 = vadd.f32 %v676, %v716
    %v718 = vpop.f32.mrb[0].mxu0
    %v719 = vpop.f32.mrb[0].mxu0
    %v720 = vadd.f32 %v679, %v719
    %v721 = vpop.f32.mrb[0].mxu0
    %722 = vdwg.mxu0
    %723 = vmatprep.subr.bf16.mxu0 0
    %724 = vmatpush1.bf16.msra.mxu0 %v520
    %725 = vmatprep.subr.bf16.mxu0 0
    %726 = vmatpush1.bf16.msra.mxu0 %v521
    %727 = vmatprep.subr.bf16.mxu0 0
    %728 = vmatpush1.bf16.msra.mxu0 %v522
    %729 = vmatprep.subr.bf16.mxu0 0
    %730 = vmatpush1.bf16.msra.mxu0 %v523
    %731 = vmatprep.subr.bf16.mxu0 0
    %732 = vmatpush1.bf16.msra.mxu0 %v524
    %733 = vmatprep.subr.bf16.mxu0 0
    %734 = vmatpush1.bf16.msra.mxu0 %v525
    %735 = vmatprep.subr.bf16.mxu0 0
    %736 = vmatpush1.bf16.msra.mxu0 %v526
    %737 = vmatprep.subr.bf16.mxu0 0
    %738 = vmatpush1.bf16.msra.mxu0 %v527
    %739 = vmatprep.subr.bf16.mxu0 0
    %740 = vmatpush1.bf16.msra.mxu0 %v528
    %741 = vmatprep.subr.bf16.mxu0 0
    %742 = vmatpush1.bf16.msra.mxu0 %v529
    %743 = vmatprep.subr.bf16.mxu0 0
    %744 = vmatpush1.bf16.msra.mxu0 %v530
    %745 = vmatprep.subr.bf16.mxu0 0
    %746 = vmatpush1.bf16.msra.mxu0 %v531
    %747 = vmatprep.subr.bf16.mxu0 0
    %748 = vmatpush1.bf16.msra.mxu0 %v532
    %749 = vmatprep.subr.bf16.mxu0 0
    %750 = vmatpush1.bf16.msra.mxu0 %v533
    %751 = vmatprep.subr.bf16.mxu0 0
    %752 = vmatpush1.bf16.msra.mxu0 %v534
    %753 = vmatprep.subr.bf16.mxu0 0
    %754 = vmatpush1.bf16.msra.mxu0 %v535
    %755 = vmatprep.mubr.bf16.mxu0 %v207
    %756 = vmatmul.mubr.bf16.gmra.mrb[0].mxu0 %v206
    %v757 = vpop.f32.mrb[0].mxu0
    %v758 = vadd.f32 %v717, %v757
    %v759 = vpop.f32.mrb[0].mxu0
    %v760 = vpop.f32.mrb[0].mxu0
    %v761 = vadd.f32 %v720, %v760
    %v762 = vpop.f32.mrb[0].mxu0
    %763 = vdwg.mxu0
    %v764 = vmul.f32 %v758, 0.5
    %v765 = vmul.f32 %v761, 0.5
    %v766 = vmul.f32 %v758, 0.70710677
    %v767 = vmul.f32 %v761, 0.70710677
    %v768 = verf.f32.pop %v766
    %v769 = verf.f32.pop %v767
    %v770 = vadd.f32 %v768, 1.0
    %v771 = vadd.f32 %v769, 1.0
    %v772 = vmul.f32 %v764, %v770
    %v773 = vmul.f32 %v765, %v771
    %v774 = vpack.c.bf16 %v773, %v772
    %v775 = vld [vmem:[%s2] sm:$0xf]
    %v776 = vld [vmem:[%s2 + $0x4] sm:$0xf]
    %v777 = vld [vmem:[%s2 + $0x8] sm:$0xf]
    %v778 = vld [vmem:[%s2 + $0xc] sm:$0xf]
    %v779 = vld [vmem:[%s2 + $0x10] sm:$0xf]
    %v780 = vld [vmem:[%s2 + $0x14] sm:$0xf]
    %v781 = vld [vmem:[%s2 + $0x18] sm:$0xf]
    %v782 = vld [vmem:[%s2 + $0x1c] sm:$0xf]
    %v783 = vld [vmem:[%s2 + $0x20] sm:$0xf]
    %v784 = vld [vmem:[%s2 + $0x24] sm:$0xf]
    %v785 = vld [vmem:[%s2 + $0x28] sm:$0xf]
    %v786 = vld [vmem:[%s2 + $0x2c] sm:$0xf]
    %v787 = vld [vmem:[%s2 + $0x30] sm:$0xf]
    %v788 = vld [vmem:[%s2 + $0x34] sm:$0xf]
    %v789 = vld [vmem:[%s2 + $0x38] sm:$0xf]
    %v790 = vld [vmem:[%s2 + $0x3c] sm:$0xf]
    %v791 = vlaneseq
    %v792 = vshrl.u32 %v791, 7
    %v793 = vsub.s32 0, %v792
    %v794 = vrot.slane %v169, %v793
    %v811 = vunpack.c.l.b16 %v775
    %v812 = vunpack.c.l.b16 %v776
    %v813 = vunpack.c.l.b16 %v777
    %v814 = vunpack.c.l.b16 %v778
    %v815 = vunpack.c.l.b16 %v779
    %v816 = vunpack.c.l.b16 %v780
    %v817 = vunpack.c.l.b16 %v781
    %v818 = vunpack.c.l.b16 %v782
    %v819 = vunpack.c.l.b16 %v783
    %v820 = vunpack.c.l.b16 %v784
    %v821 = vunpack.c.l.b16 %v785
    %v822 = vunpack.c.l.b16 %v786
    %v823 = vunpack.c.l.b16 %v787
    %v824 = vunpack.c.l.b16 %v788
    %v825 = vunpack.c.l.b16 %v789
    %v826 = vunpack.c.l.b16 %v790
    %v827 = vpack.c.b16 %v812, %v811
    %v828 = vpack.c.b16 %v814, %v813
    %v829 = vpack.c.b16 %v816, %v815
    %v830 = vpack.c.b16 %v818, %v817
    %v831 = vpack.c.b16 %v820, %v819
    %v832 = vpack.c.b16 %v822, %v821
    %v833 = vpack.c.b16 %v824, %v823
    %v834 = vpack.c.b16 %v826, %v825
    %843 = vmatprep.subr.bf16.mxu0 0
    %844 = vmatpush1.bf16.msra.mxu0 %v827
    %845 = vmatprep.subr.bf16.mxu0 0
    %846 = vmatpush1.bf16.msra.mxu0 %v828
    %847 = vmatprep.subr.bf16.mxu0 0
    %848 = vmatpush1.bf16.msra.mxu0 %v829
    %849 = vmatprep.subr.bf16.mxu0 0
    %850 = vmatpush1.bf16.msra.mxu0 %v830
    %851 = vmatprep.subr.bf16.mxu0 0
    %852 = vmatpush1.bf16.msra.mxu0 %v831
    %853 = vmatprep.subr.bf16.mxu0 0
    %854 = vmatpush1.bf16.msra.mxu0 %v832
    %855 = vmatprep.subr.bf16.mxu0 0
    %856 = vmatpush1.bf16.msra.mxu0 %v833
    %857 = vmatprep.subr.bf16.mxu0 0
    %858 = vmatpush1.bf16.msra.mxu0 %v834
    %859 = vmatprep.subr.bf16.mxu0 0
    %860 = vmatpush1.bf16.msra.mxu0 0
    %861 = vmatprep.subr.bf16.mxu0 0
    %862 = vmatpush1.bf16.msra.mxu0 0
    %863 = vmatprep.subr.bf16.mxu0 0
    %864 = vmatpush1.bf16.msra.mxu0 0
    %865 = vmatprep.subr.bf16.mxu0 0
    %866 = vmatpush1.bf16.msra.mxu0 0
    %867 = vmatprep.subr.bf16.mxu0 0
    %868 = vmatpush1.bf16.msra.mxu0 0
    %869 = vmatprep.subr.bf16.mxu0 0
    %870 = vmatpush1.bf16.msra.mxu0 0
    %871 = vmatprep.subr.bf16.mxu0 0
    %872 = vmatpush1.bf16.msra.mxu0 0
    %873 = vmatprep.subr.bf16.mxu0 0
    %874 = vmatpush1.bf16.msra.mxu0 0
    %875 = vmatprep.mubr.bf16.mxu0 0
    %876 = vmatmul.mubr.bf16.gmra.mrb[0].mxu0 %v774
    %v877 = vpop.f32.mrb[0].mxu0
    %v878 = vadd.f32 %v794, %v877
    %v879 = vpop.f32.mrb[0].mxu0
    %v880 = vpop.f32.mrb[0].mxu0
    %v881 = vadd.f32 %v794, %v880
    %v882 = vpop.f32.mrb[0].mxu0
    %883 = vdwg.mxu0
    %v884 = vadd.f32 %v878, %v758
    %v885 = vadd.f32 %v881, %v761
    %886 = vadd.xlane.f32.xlu0 %v884
    %v887 = vpop.xlane.xlu0 %886
    %888 = vadd.xlane.f32.xlu0 %v885
    %v889 = vpop.xlane.xlu0 %888
    %v890 = vrcp.pop 128.0
    %v891 = vmul.f32 %v887, %v890
    %v892 = vmul.f32 %v889, %v890
    %v893 = vsub.f32 %v884, %v891
    %v894 = vsub.f32 %v885, %v892
    %v895 = vmul.f32 %v893, %v893
    %v896 = vmul.f32 %v894, %v894
    %897 = vadd.xlane.f32.xlu0 %v895
    %v898 = vpop.xlane.xlu0 %897
    %899 = vadd.xlane.f32.xlu0 %v896
    %v900 = vpop.xlane.xlu0 %899
    %v901 = vmul.f32 %v898, %v890
    %v902 = vmul.f32 %v900, %v890
    %v903 = vadd.f32 %v901, 1e-05
    %v904 = vadd.f32 %v902, 1e-05
    %v905 = vrsqrt.pop %v903
    %v906 = vrsqrt.pop %v904
    %v907 = vmul.f32 %v893, %v905
    %v908 = vmul.f32 %v894, %v906
    %v909 = vlaneseq
    %v910 = vshrl.u32 %v909, 7
    %v911 = vsub.s32 0, %v910
    %v912 = vrot.slane %v170, %v911
    %v913 = vmul.f32 %v907, %v912
    %v914 = vmul.f32 %v908, %v912
    %v915 = vlaneseq
    %v916 = vshrl.u32 %v915, 7
    %v917 = vsub.s32 0, %v916
    %v918 = vrot.slane %v171, %v917
    %v919 = vadd.f32 %v913, %v918
    %v920 = vadd.f32 %v914, %v918
    %921 = vst [vmem:[%s4] sm:$0xff] %v919
    %922 = vst [vmem:[%s4 + $0x8] sm:$0xff] %v920
    // Predicated region
    $region22: #{_image_projection_impl.1} parent=1 // pred_check
      _
    $region23: #{_image_projection_impl.1} parent=1 // pred_check_branch
      %924 = sbr.rel (0) target = $region25
    $region24: #{_image_projection_impl.1} parent=1 // pred_region
      _
    $region25: #{_image_projection_impl.1} parent=1 // pred_fallthru
      _
    // Predicated region
    $region26: #{_image_projection_impl.1} parent=1 // pred_check
      _
    $region27: #{_image_projection_impl.1} parent=1 // pred_check_branch
      %926 = sbr.rel (0) target = $region29
    $region28: #{_image_projection_impl.1} parent=1 // pred_region
      _
    $region29: #{_image_projection_impl.1} parent=1 // pred_fallthru
      _
    %927 = vsyncpa [#allocation3], 1

</llo_original>
